<compile_context>
chip_gen: v7x
topology: tpu7x:2x2x1
jax: 0.10.0
libtpu: 0.0.40
codegen_flags: <defaults>
</compile_context>

<pallas_src>
import functools

import jax
import jax.numpy as jnp
from jax import lax
from jax.experimental import pallas as pl
from jax.experimental.pallas import tpu as pltpu

DILATION_KERNEL = 3    # cfg.model.dilation_kernel (odd)
MAX_N_PIXEL = 512      # cfg.model.max_n_pixel (static bound for sparse gather)
_HALO_H = 8            # halo block height (sublane aligned); supports k//2 <= 8


def _round_up(x, m):
    return (x + m - 1) // m * m


def _dilate_kernel(lr_ref, *rest, k, H, W, use_halo, ragged_h, ragged_w):
    """One (batch, H-tile) block of band-threshold + k x k MaxPool(stride=1).

    lr_ref:   (1, 1, TH, Wp)  f32  -- current H tile of lr_pred
    rest:     (top_ref, bot_ref, mask_ref) when use_halo else (mask_ref,)
      top_ref (1, 1, 8,  Wp)  f32  -- 8 rows ending at the tile's top edge
      bot_ref (1, 1, 8,  Wp)  f32  -- 8 rows starting at the tile's bottom edge
    mask_ref: (1, 1, TH, Wp)  int8 -- dilated {0,1} mask output
    """
    mask_ref = rest[-1]
    p = k // 2
    alpha = lr_ref[0, 0]                                   # (TH, Wp) f32
    th, wp = alpha.shape

    m = jnp.logical_and(alpha > 0.01, alpha < 0.99)

    if p == 0:
        # k == 1: the mask is the band itself.  Rows/lanes past the true H/W
        # only exist in the ragged edge block and its out-of-bounds stores are
        # dropped by Pallas, so no extra masking is needed.
        mask_ref[0, 0] = m.astype(jnp.int8)
        return

    i = pl.program_id(1)
    rows = lax.broadcasted_iota(jnp.int32, (th, wp), 0)
    lanes = lax.broadcasted_iota(jnp.int32, (th, wp), 1)

    if ragged_h:
        # Zero garbage rows past the true H so they cannot dilate upwards into
        # valid rows (only the last tile has any).
        m = jnp.logical_and(m, rows < H - i * th)
    m = m.astype(jnp.float32)

    # ---- H-direction (sublane) max: in-tile shifts (zero fill == MaxPool2d's
    #      zero padding since values are >= 0) --------------------------------
    colmax = m
    for d in range(1, p + 1):
        dn = pltpu.roll(m, shift=d % th, axis=0)           # dn[r] = m[r - d]
        colmax = jnp.maximum(colmax, jnp.where(rows >= d, dn, 0.0))
        up = pltpu.roll(m, shift=(th - d) % th, axis=0)    # up[r] = m[r + d]
        colmax = jnp.maximum(colmax, jnp.where(rows < th - d, up, 0.0))

    # ---- H-direction: halo rows from the neighbouring tiles ------------------
    if use_halo:
        top_ref, bot_ref = rest[0], rest[1]
        thr = jnp.logical_and(top_ref[0, 0] > 0.01,
                              top_ref[0, 0] < 0.99).astype(jnp.float32)  # (8,Wp)
        bhr = jnp.logical_and(bot_ref[0, 0] > 0.01,
                              bot_ref[0, 0] < 0.99).astype(jnp.float32)  # (8,Wp)
        hb = thr.shape[0]
        n_i = pl.num_programs(1)
        has_top = (i > 0).astype(jnp.float32)              # first tile: zero pad
        has_bot = (i < n_i - 1).astype(jnp.float32)        # last tile: zero pad
        for d in range(1, p + 1):
            trow = thr[hb - d] * has_top                   # row d above the tile
            colmax = jnp.maximum(
                colmax, jnp.where(rows <= p - d, trow[None, :], 0.0))
            bgate = has_bot
            if ragged_h:                                   # next tile may be < 8 rows
                bgate = bgate * ((i + 1) * th + (d - 1) < H).astype(jnp.float32)
            brow = bhr[d - 1] * bgate                      # row d below the tile
            colmax = jnp.maximum(
                colmax, jnp.where(rows >= th - 1 + d - p, brow[None, :], 0.0))

    # ---- W-direction (lane) max ----------------------------------------------
    if ragged_w:
        # Zero the lanes past the true W once (covers main tile + halo rows)
        # before they can shift left into valid columns.
        colmax = jnp.where(lanes < W, colmax, 0.0)
    dil = colmax
    for d in range(1, p + 1):
        rt = pltpu.roll(colmax, shift=d, axis=1)           # rt[:, c] = colmax[:, c-d]
        dil = jnp.maximum(dil, jnp.where(lanes >= d, rt, 0.0))
        lt = pltpu.roll(colmax, shift=wp - d, axis=1)      # lt[:, c] = colmax[:, c+d]
        dil = jnp.maximum(dil, jnp.where(lanes < wp - d, lt, 0.0))

    # dil is exactly {0.0, 1.0} -> direct int8 cast, no extra compare.
    mask_ref[0, 0] = dil.astype(jnp.int8)


def dilate_mask(lr_pred, k=DILATION_KERNEL, tile_h=1024,
                vmem_budget_bytes=36 << 20):
    """self.dilate(lr_pred) -> int8 {0,1} mask of shape (B, 1, H, W)."""
    assert k % 2 == 1, "dilation kernel must be odd"
    p = k // 2
    assert p <= _HALO_H, "halo supports k <= 17"
    B, c1, H, W = lr_pred.shape
    assert c1 == 1

    Wp = _round_up(W, 128)        # lane-dense blocks; NO HBM pad -- the ragged
    ragged_w = Wp != W            # lane tail is masked in-kernel / by Pallas

    # Per-step VMEM ~bytes/elem: 2x4 f32 input (double buffered) + 2x1 int8
    # output + ~6 tile-sized f32 temporaries (m/colmax/dil/iotas/selects) ~= 34;
    # use 36 for slack.  Keeps the total well under v7x's 64 MiB/TC.
    max_rows = max(32, (vmem_budget_bytes // (36 * Wp)) // 32 * 32)
    TH = min(_round_up(max(tile_h, 32), 32), max_rows)

    if H <= TH:
        TH, nH = H, 1             # single full-extent tile -> no halos needed
    else:
        nH = pl.cdiv(H, TH)       # TH is a multiple of 32 (int8 output tiling)
    ragged_h = nH > 1 and (nH * TH != H)
    use_halo = p > 0 and nH > 1

    kernel = functools.partial(_dilate_kernel, k=k, H=H, W=W,
                               use_halo=use_halo, ragged_h=ragged_h,
                               ragged_w=ragged_w)

    in_specs = [pl.BlockSpec((1, 1, TH, Wp), lambda b, i: (b, 0, i, 0))]
    args = [lr_pred]
    if use_halo:
        blk_per_tile = TH // _HALO_H
        last_blk = (H - 1) // _HALO_H
        in_specs += [
            # 8 rows ending at the tile's top edge (clamped at the top edge;
            # the duplicate rows are gated off in-kernel with program_id)
            pl.BlockSpec((1, 1, _HALO_H, Wp),
                         lambda b, i: (b, 0,
                                       jnp.maximum(i * blk_per_tile - 1, 0), 0)),
            # 8 rows starting at the tile's bottom edge (clamped at the bottom)
            pl.BlockSpec((1, 1, _HALO_H, Wp),
                         lambda b, i: (b, 0,
                                       jnp.minimum((i + 1) * blk_per_tile,
                                                   last_blk), 0)),
        ]
        args += [lr_pred, lr_pred]

    bytes_accessed = B * H * Wp * 4 + B * H * Wp          # f32 in + int8 out
    if use_halo:
        bytes_accessed += B * nH * 2 * _HALO_H * Wp * 4   # halo DMAs
    cost = pl.CostEstimate(flops=B * H * Wp * (4 + 6 * p),
                           transcendentals=0,
                           bytes_accessed=bytes_accessed)

    return pl.pallas_call(
        kernel,
        out_shape=jax.ShapeDtypeStruct((B, 1, H, W), jnp.int8),
        grid=(B, nH),
        in_specs=in_specs,
        out_specs=pl.BlockSpec((1, 1, TH, Wp), lambda b, i: (b, 0, i, 0)),
        compiler_params=pltpu.CompilerParams(
            dimension_semantics=("parallel", "parallel"),
            vmem_limit_bytes=48 * 1024 * 1024),
        cost_estimate=cost,
    )(*args)


def sparsemat_forward(input_dict, k=DILATION_KERNEL,
                      max_n_pixel=MAX_N_PIXEL, tile_h=1024):
    """Mirrors SparseMat.forward up to (and excluding) the SHM head."""
    xhr = input_dict["hr_image"]                  # (B, Cin, H, W)  NCHW
    lr_pred = input_dict["lr_pred_upsampled"]     # (B, 1,  H, W)  stand-in for
                                                  # upas(batch_slice(lpn(xlr)))

    if "hr_unknown" in input_dict:
        # Dilation output would be dead work -> skip the kernel entirely.
        mask = input_dict["hr_unknown"]
    else:
        mask = dilate_mask(lr_pred, k=k, tile_h=tile_h)   # (B,1,H,W) int8 {0,1}

    # generate_sparse_inputs: gather only max_n_pixel rows straight from NCHW
    # (no dense concat, no NHWC transpose).  torch.where's dynamic output size
    # has no static-shape equivalent, so a fixed bound is used: rows past
    # n_valid are zero-filled and their coords set to -1; if n_valid exceeds
    # max_n_pixel the gather silently truncates (callers must check n_valid).
    msel = mask[:, 0] > 0                                        # (B, H, W)
    b_idx, h_idx, w_idx = jnp.nonzero(msel, size=max_n_pixel, fill_value=0)
    img_rows = xhr[b_idx, :, h_idx, w_idx]                       # (N, Cin)
    lr_rows = lr_pred[b_idx, 0, h_idx, w_idx][:, None]           # (N, 1)
    lr_rows = lr_rows * 2.0 - 1.0                                # (x - 0.5) / 0.5
    sparse_x = jnp.concatenate([img_rows, lr_rows], axis=1)      # (N, Cin+1)
    coords = jnp.stack([b_idx, h_idx, w_idx], axis=1)            # (N, 3)
    n_valid = jnp.sum(msel.astype(jnp.int32))

    valid = jnp.arange(max_n_pixel, dtype=jnp.int32) < n_valid
    sparse_x = jnp.where(valid[:, None], sparse_x, 0.0)
    coords = jnp.where(valid[:, None], coords, -1)

    # TODO(synk): pred_list = self.shm(sparse_x, lr_pred, coords, B, (H, W), ctx)
    # -- SHM source not provided; returning the sparse inputs it would consume.
    return sparse_x, coords, mask, n_valid


def _reduce_window_ref(lr_pred, k):
    m0 = jnp.logical_and(lr_pred > 0.01, lr_pred < 0.99).astype(jnp.float32)
    if k == 1:
        return m0
    return lax.reduce_window(
        m0, -jnp.inf, lax.max,
        window_dimensions=(1, 1, k, k),
        window_strides=(1, 1, 1, 1),
        padding=[(0, 0), (0, 0), (k // 2, k // 2), (k // 2, k // 2)])


if __name__ == "__main__":
    key = jax.random.PRNGKey(0)
    k1, k2, k3, k4 = jax.random.split(key, 4)

    # Non-aligned spatial size: exercises the ragged-W (144 % 128 != 0) and
    # ragged-H paths, the single-tile fast path and the multi-tile halo path.
    B, C, H, W = 2, 3, 88, 144
    xhr = jax.random.uniform(k1, (B, C, H, W), dtype=jnp.float32)
    # Push ~99.8% of lr_pred to exactly 0/1 so the 0.01 < a < 0.99 band (and
    # hence the dilated mask) is sparse and non-trivial.
    u_sel = jax.random.uniform(k2, (B, 1, H, W), dtype=jnp.float32)
    u_val = jax.random.uniform(k3, (B, 1, H, W), dtype=jnp.float32)
    lr_pred = jnp.where(u_sel < 0.998, jnp.round(u_val), u_val)

    input_dict = {"hr_image": xhr, "lr_pred_upsampled": lr_pred}
    # Default tile_h -> single full-extent tile, no halo DMAs.
    sparse_x, coords, mask, n_valid = sparsemat_forward(input_dict)
    jax.block_until_ready((sparse_x, coords, mask, n_valid))

    # --- dilation correctness, all code paths --------------------------------
    mask_ref = _reduce_window_ref(lr_pred, DILATION_KERNEL)
    assert jnp.array_equal(mask.astype(jnp.float32), mask_ref), \
        "dilate mask mismatch (single-tile path)"

    # Multi-tile path with halos + ragged H (88 % 32 != 0) + ragged W.
    mask_tiled = dilate_mask(lr_pred, k=DILATION_KERNEL, tile_h=32)
    assert jnp.array_equal(mask_tiled.astype(jnp.float32), mask_ref), \
        "dilate mask mismatch (multi-tile halo path)"

    # k == 1 path (no halos, no dilation).
    mask_k1 = dilate_mask(lr_pred, k=1, tile_h=32)
    assert jnp.array_equal(mask_k1.astype(jnp.float32),
                           _reduce_window_ref(lr_pred, 1)), "k=1 mask mismatch"

    # Aligned multi-tile path (W multiple of 128, H multiple of tile).
    lr2 = jnp.where(jax.random.uniform(k4, (1, 1, 64, 128)) < 0.995,
                    jnp.round(jax.random.uniform(k2, (1, 1, 64, 128))),
                    jax.random.uniform(k3, (1, 1, 64, 128)))
    mask2 = dilate_mask(lr2, k=DILATION_KERNEL, tile_h=32)
    assert jnp.array_equal(mask2.astype(jnp.float32),
                           _reduce_window_ref(lr2, DILATION_KERNEL)), \
        "dilate mask mismatch (aligned multi-tile path)"

    # --- sparse gather correctness (pure JAX reference) ----------------------
    feat_ref = jnp.concatenate([xhr, lr_pred * 2.0 - 1.0], axis=1)
    b_i, h_i, w_i = jnp.nonzero(mask_ref[:, 0] > 0, size=MAX_N_PIXEL, fill_value=0)
    rows_ref = jnp.transpose(feat_ref, (0, 2, 3, 1))[b_i, h_i, w_i]
    valid = jnp.arange(MAX_N_PIXEL) < jnp.minimum(n_valid, MAX_N_PIXEL)
    assert jnp.allclose(jnp.where(valid[:, None], sparse_x, 0.0),
                        jnp.where(valid[:, None], rows_ref, 0.0)), \
        "sparse gather mismatch"
    assert jnp.array_equal(
        jnp.where(valid[:, None], coords, -1),
        jnp.where(valid[:, None], jnp.stack([b_i, h_i, w_i], axis=1), -1)), \
        "coords mismatch"

    print("KERNEL_OK")
</pallas_src>

<mosaic_0001>
module attributes {stable_mosaic.version = 11 : i64} {
  func.func @_dilate_kernel(%arg0: i32, %arg1: i32, %arg2: memref<1x1x88x256xf32, #tpu.memory_space<vmem>>, %arg3: memref<1x1x88x256xi8, #tpu.memory_space<vmem>>) attributes {dimension_semantics = [#tpu.dimension_semantics<parallel>, #tpu.dimension_semantics<parallel>], iteration_bounds = array<i64: 2, 1>, scalar_prefetch = 0 : i64, scratch_operands = 0 : i64, tpu.core_type = #tpu.core_type<tc>, window_params = [{transform_indices = @transform_0, window_bounds = array<i64: 1, 1, 88, 256>}, {transform_indices = @transform_1, window_bounds = array<i64: 1, 1, 88, 256>}]} {
    %c0 = arith.constant 0 : index
    %c0_0 = arith.constant 0 : index
    %c0_1 = arith.constant 0 : index
    %c0_2 = arith.constant 0 : index
    %0 = vector.load %arg2[%c0, %c0_0, %c0_1, %c0_2] : memref<1x1x88x256xf32, #tpu.memory_space<vmem>>, vector<1x1x88x256xf32>
    %1 = vector.shape_cast %0 : vector<1x1x88x256xf32> to vector<88x256xf32>
    %cst = arith.constant 0.00999999977 : f32
    %2 = vector.broadcast %cst : f32 to vector<88x256xf32>
    %3 = arith.cmpf ogt, %1, %2 : vector<88x256xf32>
    %cst_3 = arith.constant 9.900000e-01 : f32
    %4 = vector.broadcast %cst_3 : f32 to vector<88x256xf32>
    %5 = arith.cmpf olt, %1, %4 : vector<88x256xf32>
    %6 = arith.andi %3, %5 : vector<88x256xi1>
    %7 = tpu.iota {dimensions = array<i32: 0>} : vector<88x256xi32>
    %8 = tpu.iota {dimensions = array<i32: 1>} : vector<88x256xi32>
    %9 = arith.extui %6 : vector<88x256xi1> to vector<88x256xi32>
    %10 = arith.sitofp %9 : vector<88x256xi32> to vector<88x256xf32>
    %c1_i32 = arith.constant 1 : i32
    %11 = tpu.dynamic_rotate %10 by %c1_i32 dim 0 : vector<88x256xf32>, i32 -> vector<88x256xf32>
    %c1_i32_4 = arith.constant 1 : i32
    %12 = vector.broadcast %c1_i32_4 : i32 to vector<88x256xi32>
    %13 = arith.cmpi sge, %7, %12 : vector<88x256xi32>
    %cst_5 = arith.constant 0.000000e+00 : f32
    %14 = vector.broadcast %cst_5 : f32 to vector<88x256xf32>
    %15 = arith.select %13, %11, %14 : vector<88x256xi1>, vector<88x256xf32>
    %16 = arith.maximumf %10, %15 : vector<88x256xf32>
    %c87_i32 = arith.constant 87 : i32
    %17 = tpu.dynamic_rotate %10 by %c87_i32 dim 0 : vector<88x256xf32>, i32 -> vector<88x256xf32>
    %c87_i32_6 = arith.constant 87 : i32
    %18 = vector.broadcast %c87_i32_6 : i32 to vector<88x256xi32>
    %19 = arith.cmpi slt, %7, %18 : vector<88x256xi32>
    %cst_7 = arith.constant 0.000000e+00 : f32
    %20 = vector.broadcast %cst_7 : f32 to vector<88x256xf32>
    %21 = arith.select %19, %17, %20 : vector<88x256xi1>, vector<88x256xf32>
    %22 = arith.maximumf %16, %21 : vector<88x256xf32>
    %c144_i32 = arith.constant 144 : i32
    %23 = vector.broadcast %c144_i32 : i32 to vector<88x256xi32>
    %24 = arith.cmpi slt, %8, %23 : vector<88x256xi32>
    %cst_8 = arith.constant 0.000000e+00 : f32
    %25 = vector.broadcast %cst_8 : f32 to vector<88x256xf32>
    %26 = arith.select %24, %22, %25 : vector<88x256xi1>, vector<88x256xf32>
    %c1_i32_9 = arith.constant 1 : i32
    %27 = tpu.dynamic_rotate %26 by %c1_i32_9 dim 1 : vector<88x256xf32>, i32 -> vector<88x256xf32>
    %c1_i32_10 = arith.constant 1 : i32
    %28 = vector.broadcast %c1_i32_10 : i32 to vector<88x256xi32>
    %29 = arith.cmpi sge, %8, %28 : vector<88x256xi32>
    %cst_11 = arith.constant 0.000000e+00 : f32
    %30 = vector.broadcast %cst_11 : f32 to vector<88x256xf32>
    %31 = arith.select %29, %27, %30 : vector<88x256xi1>, vector<88x256xf32>
    %32 = arith.maximumf %26, %31 : vector<88x256xf32>
    %c255_i32 = arith.constant 255 : i32
    %33 = tpu.dynamic_rotate %26 by %c255_i32 dim 1 : vector<88x256xf32>, i32 -> vector<88x256xf32>
    %c255_i32_12 = arith.constant 255 : i32
    %34 = vector.broadcast %c255_i32_12 : i32 to vector<88x256xi32>
    %35 = arith.cmpi slt, %8, %34 : vector<88x256xi32>
    %cst_13 = arith.constant 0.000000e+00 : f32
    %36 = vector.broadcast %cst_13 : f32 to vector<88x256xf32>
    %37 = arith.select %35, %33, %36 : vector<88x256xi1>, vector<88x256xf32>
    %38 = arith.maximumf %32, %37 : vector<88x256xf32>
    %39 = arith.fptosi %38 : vector<88x256xf32> to vector<88x256xi8>
    %c0_14 = arith.constant 0 : index
    %c0_15 = arith.constant 0 : index
    %c0_16 = arith.constant 0 : index
    %c0_17 = arith.constant 0 : index
    %40 = vector.load %arg3[%c0_14, %c0_15, %c0_16, %c0_17] : memref<1x1x88x256xi8, #tpu.memory_space<vmem>>, vector<1x1x88x256xi8>
    %41 = vector.shape_cast %40 : vector<1x1x88x256xi8> to vector<88x256xi8>
    %42 = vector.shape_cast %39 : vector<88x256xi8> to vector<1x1x88x256xi8>
    tpu.vector_store %arg3[%c0_14, %c0_15, %c0_16, %c0_17], %42 {strides = array<i32>} : memref<1x1x88x256xi8, #tpu.memory_space<vmem>>, vector<1x1x88x256xi8>,
    return
  }
  func.func @transform_0(%arg0: i32, %arg1: i32) -> (i32, i32, i32, i32) {
    %c0_i32 = arith.constant 0 : i32
    %c0_i32_0 = arith.constant 0 : i32
    %c0_i32_1 = arith.constant 0 : i32
    return %arg0, %c0_i32, %arg1, %c0_i32_0 : i32, i32, i32, i32
  }
  func.func @transform_1(%arg0: i32, %arg1: i32) -> (i32, i32, i32, i32) {
    %c0_i32 = arith.constant 0 : i32
    %c0_i32_0 = arith.constant 0 : i32
    %c0_i32_1 = arith.constant 0 : i32
    return %arg0, %c0_i32, %arg1, %c0_i32_0 : i32, i32, i32, i32
  }
}

</mosaic_0001>

<llo_original>
// kernel: tpu_custom_call.1
$region0: #{tpu_custom_call.1}
  #allocation0 [shape = 'u32[]', space=smem, size = 0x4, offset = 0x4, fixed_abs, tag = 'smem constant byte address 0x4 - core index']
  #allocation1 [shape = 'u32[144,128]{1,0:T(1,128)}', space=vmem, size = 0x12000, scoped, tag = 'internal scratch']
  %s0 = inlined_call_operand.vmem [shape: f32[2,1,88,144], index: 0, kind: input, shape index: {}]
  %s1 = inlined_call_operand.vmem [shape: s8[2,1,88,144], index: 1, kind: output, shape index: {}]
  %s2 = sld [smem:[#allocation0]]
  $region37: #{tpu_custom_call.1} parent=0
    _
  %s4 = ssub.s32 1, %s2
  %s5 = scalar_select 0, %s4, %s2
  loop: start=0, step=1, limit=4
  $region2: #{tpu_custom_call.1} parent=0 // loop_pre_header
    _
  $region3: #{tpu_custom_call.1} parent=0 // loop_header
    %s7 = sphi 0, %s11
    %p8 = scmp.ge.s32.totalorder %s7, 4
    %s14 = sphi 0, %s26
    %s15 = sphi 0, %s22
    %s16 = sphi 0, %s14
    %s17 = sphi 0, %s15
    %s18 = sphi 0, %s16
    %s19 = sphi 0, %s17
    %s31 = sphi 0, %s33
    %s34 = sphi 0, %s31
    %s35 = sphi 0, %s34
    %s51 = sphi 0, %s35
    %s59 = sphi 0, %s61
    %s62 = sphi 0, %s59
    %s63 = sphi 0, %s62
    %s79 = sphi 0, %s63
  $region4: #{tpu_custom_call.1} parent=0 // loop_header_branch
    %10 = sbr.rel (%p8) target = $region8
  $region5: #{tpu_custom_call.1} parent=0 // loop_body
    %s12 = ssub.s32 %s7, 1
    %s13 = ssub.s32 %s7, 2
    %s20 = sadd.s32 1, %s15
    %p21 = scmp.ge.s32.totalorder %s20, 1
    %s22 = scalar_select %p21, 0, %s20
    %s23 = sadd.s32 1, %s14
    %s24 = scalar_select %p21, %s23, %s14
    %p25 = scmp.ge.s32.totalorder %s24, 2
    %s26 = scalar_select %p25, 0, %s24
    %s27 = ssub.s32 %s14, %s26
    %s28 = ssub.s32 %s15, %s22
    %s29 = sor.u32 %s27, %s28
    %p30 = scmp.eq.s32.totalorder %s29, 0
    %s32 = sadd.s32 %s31, 1
    %s33 = scalar_select %p30, %s31, %s32
    %p36 = pneg %p30
    %p37 = scmp.eq.s32.totalorder %s7, 1
    %p38 = por %p36, %p37
    %p39 = scmp.ne.s32.totalorder %s31, %s34
    %p40 = scmp.eq.s32.totalorder %s7, 0
    %p41 = por %p39, %p40
    %p42 = scmp.ne.s32.totalorder %s31, %s34
    %p43 = scmp.eq.s32.totalorder %s12, 1
    %p44 = por %p42, %p43
    %p45 = scmp.ne.s32.totalorder %s34, %s35
    %p46 = scmp.eq.s32.totalorder %s12, 0
    %p47 = por %p45, %p46
    %p48 = scmp.ne.s32.totalorder %s34, %s35
    %p49 = scmp.eq.s32.totalorder %s13, 1
    %p50 = por %p48, %p49
    %p52 = scmp.ne.s32.totalorder %s35, %s51
    %p53 = scmp.eq.s32.totalorder %s13, 0
    %p54 = por %p52, %p53
    %s55 = ssub.s32 %s14, %s26
    %s56 = ssub.s32 %s15, %s22
    %s57 = sor.u32 %s55, %s56
    %p58 = scmp.eq.s32.totalorder %s57, 0
    %s60 = sadd.s32 %s59, 1
    %s61 = scalar_select %p58, %s59, %s60
    %p64 = pneg %p58
    %p65 = scmp.eq.s32.totalorder %s7, 1
    %p66 = por %p64, %p65
    %p67 = scmp.ne.s32.totalorder %s59, %s62
    %p68 = scmp.eq.s32.totalorder %s7, 0
    %p69 = por %p67, %p68
    %p70 = scmp.ne.s32.totalorder %s59, %s62
    %p71 = scmp.eq.s32.totalorder %s12, 1
    %p72 = por %p70, %p71
    %p73 = scmp.ne.s32.totalorder %s62, %s63
    %p74 = scmp.eq.s32.totalorder %s12, 0
    %p75 = por %p73, %p74
    %p76 = scmp.ne.s32.totalorder %s62, %s63
    %p77 = scmp.eq.s32.totalorder %s13, 1
    %p78 = por %p76, %p77
    %p80 = scmp.ne.s32.totalorder %s63, %s79
    %p81 = scmp.eq.s32.totalorder %s13, 0
    %p82 = por %p80, %p81
    %p83 = scmp.le.s32.totalorder 1, %s7
    %p84 = scmp.lt.s32.totalorder %s7, 3
    %p85 = pnand %p83, %p84
    %p86 = pneg %p85
    // Predicated region
    $region9: #{tpu_custom_call.1} parent=5 // pred_check
      _
    $region10: #{tpu_custom_call.1} parent=5 // pred_check_branch
      %88 = sbr.rel (%p85) target = $region12
    $region11: #{tpu_custom_call.1} parent=5 // pred_region
      %s89 = ssub.s32 %s7, 1
    $region12: #{tpu_custom_call.1} parent=5 // pred_fallthru
      _
    %p90 = scmp.lt.s32.totalorder %s7, 2
    // Predicated region
    $region13: #{tpu_custom_call.1} parent=5 // pred_check
      %p91 = pneg %p90
    $region14: #{tpu_custom_call.1} parent=5 // pred_check_branch
      %93 = sbr.rel (%p91) target = $region16
    $region15: #{tpu_custom_call.1} parent=5 // pred_region
      // Predicated region
      $region17: #{tpu_custom_call.1} parent=15 // pred_check
        %p94 = pneg %p41
      $region18: #{tpu_custom_call.1} parent=15 // pred_check_branch
        %96 = sbr.rel (%p94) target = $region20
      $region19: #{tpu_custom_call.1} parent=15 // pred_region
        %s97 = smul.u32 11, %s15
        %p98 = scmp.lt.s32.totalorder %s14, 1
        %s99 = scalar_select %p98, %s14, 1
        %p100 = scmp.lt.s32.totalorder %s97, 10
        %s101 = scalar_select %p100, %s97, 10
        %s102 = smul.addr %s101, 2
        %s103 = smul.addr %s99, 22
        %s104 = sadd.s32 %s102, %s103
        %s105 = smul.addr %s104, 8
        %s106 = scalar_lea.vmem %s0, %s105
        %s107 = smul.u32 11, %s15
      $region20: #{tpu_custom_call.1} parent=15 // pred_fallthru
        _
    $region16: #{tpu_custom_call.1} parent=5 // pred_fallthru
      _
    %p108 = scmp.le.s32.totalorder 1, %s7
    %p109 = scmp.lt.s32.totalorder %s7, 3
    %p110 = pnand %p108, %p109
    %p111 = pneg %p110
    // Predicated region
    $region21: #{tpu_custom_call.1} parent=5 // pred_check
      _
    $region22: #{tpu_custom_call.1} parent=5 // pred_check_branch
      %113 = sbr.rel (%p110) target = $region24
    $region23: #{tpu_custom_call.1} parent=5 // pred_region
      %s114 = ssub.s32 %s7, 1
      %s115 = smul.u32 11, %s17
      %p116 = scmp.lt.s32.totalorder %s16, 1
      %s117 = scalar_select %p116, %s16, 1
      %p118 = scmp.lt.s32.totalorder %s115, 10
      %s119 = scalar_select %p118, %s115, 10
      %s120 = smul.addr %s119, 2
      %s121 = smul.addr %s117, 22
      %s122 = sadd.s32 %s120, %s121
      %s123 = smul.addr %s122, 8
      %s124 = scalar_lea.vmem %s0, %s123
      %p125 = pneg %p47
      %p126 = pneg %p44
      %p127 = pneg %p75
      %p128 = pneg %p72
      %s129 = smul.u32 11, %s17
      %p130 = scmp.lt.s32.totalorder %s16, 1
      %s131 = scalar_select %p130, %s16, 1
      %p132 = scmp.lt.s32.totalorder %s129, 10
      %s133 = scalar_select %p132, %s129, 10
      %s134 = smul.addr %s133, 2
      %s135 = smul.addr %s131, 22
      %s136 = sadd.s32 %s134, %s135
      %s137 = smul.addr %s136, 2
      %s138 = scalar_lea.vmem %s1, %s137
      %s139 = smul.u32 11, %s17
      %p140 = scmp.lt.s32.totalorder %s16, 1
      %s141 = scalar_select %p140, %s16, 1
      %p142 = scmp.lt.s32.totalorder %s139, 10
      %s143 = scalar_select %p142, %s139, 10
      %s144 = smul.addr %s143, 2
      %s145 = smul.addr %s141, 22
      %s146 = sadd.s32 %s144, %s145
      %s147 = smul.addr %s146, 8
      %s148 = scalar_lea.vmem %s0, %s147
      %s149 = smul.u32 11, %s17
      %s150 = smul.u32 11, %s17
      %p151 = scmp.lt.s32.totalorder %s16, 1
      %s152 = scalar_select %p151, %s16, 1
      %p153 = scmp.lt.s32.totalorder %s150, 10
      %s154 = scalar_select %p153, %s150, 10
      %s155 = smul.addr %s154, 2
      %s156 = smul.addr %s152, 22
      %s157 = sadd.s32 %s155, %s156
      %s158 = smul.addr %s157, 2
      %s159 = scalar_lea.vmem %s1, %s158
      %s160 = smul.u32 11, %s17
      %v161 = vld [vmem:[%s148] sm:$0xff]
      %v162 = vld [vmem:[%s148 + $0x8] sm:$0xff]
      %v163 = vld [vmem:[%s148 + $0x10] sm:$0xff]
      %v164 = vld [vmem:[%s148 + $0x18] sm:$0xff]
      %v165 = vld [vmem:[%s148 + $0x20] sm:$0xff]
      %v166 = vld [vmem:[%s148 + $0x28] sm:$0xff]
      %v167 = vld [vmem:[%s148 + $0x30] sm:$0xff]
      %v168 = vld [vmem:[%s148 + $0x38] sm:$0xff]
      %v169 = vld [vmem:[%s148 + $0x40] sm:$0xff]
      %v170 = vld [vmem:[%s148 + $0x48] sm:$0xff]
      %v171 = vld [vmem:[%s148 + $0x50] sm:$0xff]
      %v172 = vld [vmem:[%s148 + $0x58] sm:$0xff]
      %v173 = vld [vmem:[%s148 + $0x60] sm:$0xff]
      %v174 = vld [vmem:[%s148 + $0x68] sm:$0xff]
      %v175 = vld [vmem:[%s148 + $0x70] sm:$0xff]
      %v176 = vld [vmem:[%s148 + $0x78] sm:$0xff]
      %v177 = vld [vmem:[%s148 + $0x80] sm:$0xff]
      %v178 = vld [vmem:[%s148 + $0x88] sm:$0xff]
      %v179 = vld [vmem:[%s148 + $0x90] sm:$0xff]
      %v180 = vld [vmem:[%s148 + $0x98] sm:$0xff]
      %v181 = vld [vmem:[%s148 + $0xa0] sm:$0xff]
      %v182 = vld [vmem:[%s148 + $0xa8] sm:$0xff]
      %vm183 = vcmp.gt.f32.partialorder %v161, 0.01
      %vm184 = vcmp.gt.f32.partialorder %v162, 0.01
      %vm185 = vcmp.gt.f32.partialorder %v163, 0.01
      %vm186 = vcmp.gt.f32.partialorder %v164, 0.01
      %vm187 = vcmp.gt.f32.partialorder %v165, 0.01
      %vm188 = vcmp.gt.f32.partialorder %v166, 0.01
      %vm189 = vcmp.gt.f32.partialorder %v167, 0.01
      %vm190 = vcmp.gt.f32.partialorder %v168, 0.01
      %vm191 = vcmp.gt.f32.partialorder %v169, 0.01
      %vm192 = vcmp.gt.f32.partialorder %v170, 0.01
      %vm193 = vcmp.gt.f32.partialorder %v171, 0.01
      %vm194 = vcmp.gt.f32.partialorder %v172, 0.01
      %vm195 = vcmp.gt.f32.partialorder %v173, 0.01
      %vm196 = vcmp.gt.f32.partialorder %v174, 0.01
      %vm197 = vcmp.gt.f32.partialorder %v175, 0.01
      %vm198 = vcmp.gt.f32.partialorder %v176, 0.01
      %vm199 = vcmp.gt.f32.partialorder %v177, 0.01
      %vm200 = vcmp.gt.f32.partialorder %v178, 0.01
      %vm201 = vcmp.gt.f32.partialorder %v179, 0.01
      %vm202 = vcmp.gt.f32.partialorder %v180, 0.01
      %vm203 = vcmp.gt.f32.partialorder %v181, 0.01
      %vm204 = vcmp.gt.f32.partialorder %v182, 0.01
      %vm205 = vcmp.lt.f32.partialorder %v161, 0.99
      %vm206 = vcmp.lt.f32.partialorder %v162, 0.99
      %vm207 = vcmp.lt.f32.partialorder %v163, 0.99
      %vm208 = vcmp.lt.f32.partialorder %v164, 0.99
      %vm209 = vcmp.lt.f32.partialorder %v165, 0.99
      %vm210 = vcmp.lt.f32.partialorder %v166, 0.99
      %vm211 = vcmp.lt.f32.partialorder %v167, 0.99
      %vm212 = vcmp.lt.f32.partialorder %v168, 0.99
      %vm213 = vcmp.lt.f32.partialorder %v169, 0.99
      %vm214 = vcmp.lt.f32.partialorder %v170, 0.99
      %vm215 = vcmp.lt.f32.partialorder %v171, 0.99
      %vm216 = vcmp.lt.f32.partialorder %v172, 0.99
      %vm217 = vcmp.lt.f32.partialorder %v173, 0.99
      %vm218 = vcmp.lt.f32.partialorder %v174, 0.99
      %vm219 = vcmp.lt.f32.partialorder %v175, 0.99
      %vm220 = vcmp.lt.f32.partialorder %v176, 0.99
      %vm221 = vcmp.lt.f32.partialorder %v177, 0.99
      %vm222 = vcmp.lt.f32.partialorder %v178, 0.99
      %vm223 = vcmp.lt.f32.partialorder %v179, 0.99
      %vm224 = vcmp.lt.f32.partialorder %v180, 0.99
      %vm225 = vcmp.lt.f32.partialorder %v181, 0.99
      %vm226 = vcmp.lt.f32.partialorder %v182, 0.99
      %vm227 = vmand %vm183, %vm205
      %vm228 = vmand %vm184, %vm206
      %vm229 = vmand %vm185, %vm207
      %vm230 = vmand %vm186, %vm208
      %vm231 = vmand %vm187, %vm209
      %vm232 = vmand %vm188, %vm210
      %vm233 = vmand %vm189, %vm211
      %vm234 = vmand %vm190, %vm212
      %vm235 = vmand %vm191, %vm213
      %vm236 = vmand %vm192, %vm214
      %vm237 = vmand %vm193, %vm215
      %vm238 = vmand %vm194, %vm216
      %vm239 = vmand %vm195, %vm217
      %vm240 = vmand %vm196, %vm218
      %vm241 = vmand %vm197, %vm219
      %vm242 = vmand %vm198, %vm220
      %vm243 = vmand %vm199, %vm221
      %vm244 = vmand %vm200, %vm222
      %vm245 = vmand %vm201, %vm223
      %vm246 = vmand %vm202, %vm224
      %vm247 = vmand %vm203, %vm225
      %vm248 = vmand %vm204, %vm226
      %v249 = vlaneseq
      %v250 = vshrl.u32 %v249, 7
      %v251 = vadd.s32 %v250, 8
      %v252 = vadd.s32 %v250, 16
      %v253 = vadd.s32 %v250, 24
      %v254 = vadd.s32 %v250, 32
      %v255 = vadd.s32 %v250, 40
      %v256 = vadd.s32 %v250, 48
      %v257 = vadd.s32 %v250, 56
      %v258 = vadd.s32 %v250, 64
      %v259 = vadd.s32 %v250, 72
      %v260 = vadd.s32 %v250, 80
      %v261 = vlaneseq
      %v262 = vand.u32 %v261, 127
      %v263 = vadd.s32 %v262, 128
      %v264 = vsel %vm227, 1, 0
      %v265 = vsel %vm228, 1, 0
      %v266 = vsel %vm229, 1, 0
      %v267 = vsel %vm230, 1, 0
      %v268 = vsel %vm231, 1, 0
      %v269 = vsel %vm232, 1, 0
      %v270 = vsel %vm233, 1, 0
      %v271 = vsel %vm234, 1, 0
      %v272 = vsel %vm235, 1, 0
      %v273 = vsel %vm236, 1, 0
      %v274 = vsel %vm237, 1, 0
      %v275 = vsel %vm238, 1, 0
      %v276 = vsel %vm239, 1, 0
      %v277 = vsel %vm240, 1, 0
      %v278 = vsel %vm241, 1, 0
      %v279 = vsel %vm242, 1, 0
      %v280 = vsel %vm243, 1, 0
      %v281 = vsel %vm244, 1, 0
      %v282 = vsel %vm245, 1, 0
      %v283 = vsel %vm246, 1, 0
      %v284 = vsel %vm247, 1, 0
      %v285 = vsel %vm248, 1, 0
      %v286 = vcvt.s32.f32 %v264
      %v287 = vcvt.s32.f32 %v265
      %v288 = vcvt.s32.f32 %v266
      %v289 = vcvt.s32.f32 %v267
      %v290 = vcvt.s32.f32 %v268
      %v291 = vcvt.s32.f32 %v269
      %v292 = vcvt.s32.f32 %v270
      %v293 = vcvt.s32.f32 %v271
      %v294 = vcvt.s32.f32 %v272
      %v295 = vcvt.s32.f32 %v273
      %v296 = vcvt.s32.f32 %v274
      %v297 = vcvt.s32.f32 %v275
      %v298 = vcvt.s32.f32 %v276
      %v299 = vcvt.s32.f32 %v277
      %v300 = vcvt.s32.f32 %v278
      %v301 = vcvt.s32.f32 %v279
      %v302 = vcvt.s32.f32 %v280
      %v303 = vcvt.s32.f32 %v281
      %v304 = vcvt.s32.f32 %v282
      %v305 = vcvt.s32.f32 %v283
      %v306 = vcvt.s32.f32 %v284
      %v307 = vcvt.s32.f32 %v285
      %v308 = vrot.slane %v286, 7
      %v309 = vrot.slane %v287, 7
      %v310 = vrot.slane %v288, 7
      %v311 = vrot.slane %v289, 7
      %v312 = vrot.slane %v290, 7
      %v313 = vrot.slane %v291, 7
      %v314 = vrot.slane %v292, 7
      %v315 = vrot.slane %v293, 7
      %v316 = vrot.slane %v294, 7
      %v317 = vrot.slane %v295, 7
      %v318 = vrot.slane %v296, 7
      %v319 = vrot.slane %v297, 7
      %v320 = vrot.slane %v298, 7
      %v321 = vrot.slane %v299, 7
      %v322 = vrot.slane %v300, 7
      %v323 = vrot.slane %v301, 7
      %v324 = vrot.slane %v302, 7
      %v325 = vrot.slane %v303, 7
      %v326 = vrot.slane %v304, 7
      %v327 = vrot.slane %v305, 7
      %v328 = vrot.slane %v306, 7
      %v329 = vrot.slane %v307, 7
      %vm330 = vcmp.lt.s32.totalorder %v250, 1
      %v331 = vsel %vm330, %v326, %v328
      %v332 = vsel %vm330, %v327, %v329
      %v333 = vsel %vm330, %v324, %v326
      %v334 = vsel %vm330, %v325, %v327
      %v335 = vsel %vm330, %v322, %v324
      %v336 = vsel %vm330, %v323, %v325
      %v337 = vsel %vm330, %v320, %v322
      %v338 = vsel %vm330, %v321, %v323
      %v339 = vsel %vm330, %v318, %v320
      %v340 = vsel %vm330, %v319, %v321
      %v341 = vsel %vm330, %v316, %v318
      %v342 = vsel %vm330, %v317, %v319
      %v343 = vsel %vm330, %v314, %v316
      %v344 = vsel %vm330, %v315, %v317
      %v345 = vsel %vm330, %v312, %v314
      %v346 = vsel %vm330, %v313, %v315
      %v347 = vsel %vm330, %v310, %v312
      %v348 = vsel %vm330, %v311, %v313
      %v349 = vsel %vm330, %v308, %v310
      %v350 = vsel %vm330, %v309, %v311
      %v351 = vsel %vm330, %v328, %v308
      %v352 = vsel %vm330, %v329, %v309
      %vm353 = vcmp.ge.s32.totalorder %v250, 1
      %vm354 = vcmp.ge.s32.totalorder %v251, 1
      %vm355 = vcmp.ge.s32.totalorder %v252, 1
      %vm356 = vcmp.ge.s32.totalorder %v253, 1
      %vm357 = vcmp.ge.s32.totalorder %v254, 1
      %vm358 = vcmp.ge.s32.totalorder %v255, 1
      %vm359 = vcmp.ge.s32.totalorder %v256, 1
      %vm360 = vcmp.ge.s32.totalorder %v257, 1
      %vm361 = vcmp.ge.s32.totalorder %v258, 1
      %vm362 = vcmp.ge.s32.totalorder %v259, 1
      %vm363 = vcmp.ge.s32.totalorder %v260, 1
      %v364 = vsel %vm353, %v351, 0.0
      %v365 = vsel %vm353, %v352, 0.0
      %v366 = vsel %vm354, %v349, 0.0
      %v367 = vsel %vm354, %v350, 0.0
      %v368 = vsel %vm355, %v347, 0.0
      %v369 = vsel %vm355, %v348, 0.0
      %v370 = vsel %vm356, %v345, 0.0
      %v371 = vsel %vm356, %v346, 0.0
      %v372 = vsel %vm357, %v343, 0.0
      %v373 = vsel %vm357, %v344, 0.0
      %v374 = vsel %vm358, %v341, 0.0
      %v375 = vsel %vm358, %v342, 0.0
      %v376 = vsel %vm359, %v339, 0.0
      %v377 = vsel %vm359, %v340, 0.0
      %v378 = vsel %vm360, %v337, 0.0
      %v379 = vsel %vm360, %v338, 0.0
      %v380 = vsel %vm361, %v335, 0.0
      %v381 = vsel %vm361, %v336, 0.0
      %v382 = vsel %vm362, %v333, 0.0
      %v383 = vsel %vm362, %v334, 0.0
      %v384 = vsel %vm363, %v331, 0.0
      %v385 = vsel %vm363, %v332, 0.0
      %v386 = vmax.f32 %v286, %v364
      %v387 = vmax.f32 %v287, %v365
      %v388 = vmax.f32 %v288, %v366
      %v389 = vmax.f32 %v289, %v367
      %v390 = vmax.f32 %v290, %v368
      %v391 = vmax.f32 %v291, %v369
      %v392 = vmax.f32 %v292, %v370
      %v393 = vmax.f32 %v293, %v371
      %v394 = vmax.f32 %v294, %v372
      %v395 = vmax.f32 %v295, %v373
      %v396 = vmax.f32 %v296, %v374
      %v397 = vmax.f32 %v297, %v375
      %v398 = vmax.f32 %v298, %v376
      %v399 = vmax.f32 %v299, %v377
      %v400 = vmax.f32 %v300, %v378
      %v401 = vmax.f32 %v301, %v379
      %v402 = vmax.f32 %v302, %v380
      %v403 = vmax.f32 %v303, %v381
      %v404 = vmax.f32 %v304, %v382
      %v405 = vmax.f32 %v305, %v383
      %v406 = vmax.f32 %v306, %v384
      %v407 = vmax.f32 %v307, %v385
      %v408 = vrot.slane %v286, 1
      %v409 = vrot.slane %v287, 1
      %v410 = vrot.slane %v288, 1
      %v411 = vrot.slane %v289, 1
      %v412 = vrot.slane %v290, 1
      %v413 = vrot.slane %v291, 1
      %v414 = vrot.slane %v292, 1
      %v415 = vrot.slane %v293, 1
      %v416 = vrot.slane %v294, 1
      %v417 = vrot.slane %v295, 1
      %v418 = vrot.slane %v296, 1
      %v419 = vrot.slane %v297, 1
      %v420 = vrot.slane %v298, 1
      %v421 = vrot.slane %v299, 1
      %v422 = vrot.slane %v300, 1
      %v423 = vrot.slane %v301, 1
      %v424 = vrot.slane %v302, 1
      %v425 = vrot.slane %v303, 1
      %v426 = vrot.slane %v304, 1
      %v427 = vrot.slane %v305, 1
      %v428 = vrot.slane %v306, 1
      %v429 = vrot.slane %v307, 1
      %vm430 = vcmp.lt.s32.totalorder %v250, 7
      %v431 = vsel %vm430, %v426, %v428
      %v432 = vsel %vm430, %v427, %v429
      %v433 = vsel %vm430, %v424, %v426
      %v434 = vsel %vm430, %v425, %v427
      %v435 = vsel %vm430, %v422, %v424
      %v436 = vsel %vm430, %v423, %v425
      %v437 = vsel %vm430, %v420, %v422
      %v438 = vsel %vm430, %v421, %v423
      %v439 = vsel %vm430, %v418, %v420
      %v440 = vsel %vm430, %v419, %v421
      %v441 = vsel %vm430, %v416, %v418
      %v442 = vsel %vm430, %v417, %v419
      %v443 = vsel %vm430, %v414, %v416
      %v444 = vsel %vm430, %v415, %v417
      %v445 = vsel %vm430, %v412, %v414
      %v446 = vsel %vm430, %v413, %v415
      %v447 = vsel %vm430, %v410, %v412
      %v448 = vsel %vm430, %v411, %v413
      %v449 = vsel %vm430, %v408, %v410
      %v450 = vsel %vm430, %v409, %v411
      %v451 = vsel %vm430, %v428, %v408
      %v452 = vsel %vm430, %v429, %v409
      %vm453 = vcmp.lt.s32.totalorder %v250, 87
      %vm454 = vcmp.lt.s32.totalorder %v251, 87
      %vm455 = vcmp.lt.s32.totalorder %v252, 87
      %vm456 = vcmp.lt.s32.totalorder %v253, 87
      %vm457 = vcmp.lt.s32.totalorder %v254, 87
      %vm458 = vcmp.lt.s32.totalorder %v255, 87
      %vm459 = vcmp.lt.s32.totalorder %v256, 87
      %vm460 = vcmp.lt.s32.totalorder %v257, 87
      %vm461 = vcmp.lt.s32.totalorder %v258, 87
      %vm462 = vcmp.lt.s32.totalorder %v259, 87
      %vm463 = vcmp.lt.s32.totalorder %v260, 87
      %v464 = vsel %vm453, %v449, 0.0
      %v465 = vsel %vm453, %v450, 0.0
      %v466 = vsel %vm454, %v447, 0.0
      %v467 = vsel %vm454, %v448, 0.0
      %v468 = vsel %vm455, %v445, 0.0
      %v469 = vsel %vm455, %v446, 0.0
      %v470 = vsel %vm456, %v443, 0.0
      %v471 = vsel %vm456, %v444, 0.0
      %v472 = vsel %vm457, %v441, 0.0
      %v473 = vsel %vm457, %v442, 0.0
      %v474 = vsel %vm458, %v439, 0.0
      %v475 = vsel %vm458, %v440, 0.0
      %v476 = vsel %vm459, %v437, 0.0
      %v477 = vsel %vm459, %v438, 0.0
      %v478 = vsel %vm460, %v435, 0.0
      %v479 = vsel %vm460, %v436, 0.0
      %v480 = vsel %vm461, %v433, 0.0
      %v481 = vsel %vm461, %v434, 0.0
      %v482 = vsel %vm462, %v431, 0.0
      %v483 = vsel %vm462, %v432, 0.0
      %v484 = vsel %vm463, %v451, 0.0
      %v485 = vsel %vm463, %v452, 0.0
      %v486 = vmax.f32 %v386, %v464
      %v487 = vmax.f32 %v387, %v465
      %v488 = vmax.f32 %v388, %v466
      %v489 = vmax.f32 %v389, %v467
      %v490 = vmax.f32 %v390, %v468
      %v491 = vmax.f32 %v391, %v469
      %v492 = vmax.f32 %v392, %v470
      %v493 = vmax.f32 %v393, %v471
      %v494 = vmax.f32 %v394, %v472
      %v495 = vmax.f32 %v395, %v473
      %v496 = vmax.f32 %v396, %v474
      %v497 = vmax.f32 %v397, %v475
      %v498 = vmax.f32 %v398, %v476
      %v499 = vmax.f32 %v399, %v477
      %v500 = vmax.f32 %v400, %v478
      %v501 = vmax.f32 %v401, %v479
      %v502 = vmax.f32 %v402, %v480
      %v503 = vmax.f32 %v403, %v481
      %v504 = vmax.f32 %v404, %v482
      %v505 = vmax.f32 %v405, %v483
      %v506 = vmax.f32 %v406, %v484
      %v507 = vmax.f32 %v407, %v485
      %vm508 = vcmp.lt.s32.totalorder %v262, 144
      %vm509 = vcmp.lt.s32.totalorder %v263, 144
      %v510 = vsel %vm508, %v486, 0.0
      %v511 = vsel %vm509, %v487, 0.0
      %v512 = vsel %vm508, %v488, 0.0
      %v513 = vsel %vm509, %v489, 0.0
      %v514 = vsel %vm508, %v490, 0.0
      %v515 = vsel %vm509, %v491, 0.0
      %v516 = vsel %vm508, %v492, 0.0
      %v517 = vsel %vm509, %v493, 0.0
      %v518 = vsel %vm508, %v494, 0.0
      %v519 = vsel %vm509, %v495, 0.0
      %v520 = vsel %vm508, %v496, 0.0
      %v521 = vsel %vm509, %v497, 0.0
      %v522 = vsel %vm508, %v498, 0.0
      %v523 = vsel %vm509, %v499, 0.0
      %v524 = vsel %vm508, %v500, 0.0
      %v525 = vsel %vm509, %v501, 0.0
      %v526 = vsel %vm508, %v502, 0.0
      %v527 = vsel %vm509, %v503, 0.0
      %v528 = vsel %vm508, %v504, 0.0
      %v529 = vsel %vm509, %v505, 0.0
      %v530 = vsel %vm508, %v506, 0.0
      %v531 = vsel %vm509, %v507, 0.0
      %532 = vrot.lane.b32.xlu0 %v510, 1
      %v533 = vpop.permute.xlu0 %532
      %534 = vrot.lane.b32.xlu0 %v512, 1
      %v535 = vpop.permute.xlu0 %534
      %536 = vrot.lane.b32.xlu0 %v514, 1
      %v537 = vpop.permute.xlu0 %536
      %538 = vrot.lane.b32.xlu0 %v516, 1
      %v539 = vpop.permute.xlu0 %538
      %540 = vrot.lane.b32.xlu0 %v518, 1
      %v541 = vpop.permute.xlu0 %540
      %542 = vrot.lane.b32.xlu0 %v520, 1
      %v543 = vpop.permute.xlu0 %542
      %544 = vrot.lane.b32.xlu0 %v522, 1
      %v545 = vpop.permute.xlu0 %544
      %546 = vrot.lane.b32.xlu0 %v524, 1
      %v547 = vpop.permute.xlu0 %546
      %548 = vrot.lane.b32.xlu0 %v526, 1
      %v549 = vpop.permute.xlu0 %548
      %550 = vrot.lane.b32.xlu0 %v528, 1
      %v551 = vpop.permute.xlu0 %550
      %552 = vrot.lane.b32.xlu0 %v530, 1
      %v553 = vpop.permute.xlu0 %552
      %554 = vrot.lane.b32.xlu0 %v511, 1
      %v555 = vpop.permute.xlu0 %554
      %556 = vrot.lane.b32.xlu0 %v513, 1
      %v557 = vpop.permute.xlu0 %556
      %558 = vrot.lane.b32.xlu0 %v515, 1
      %v559 = vpop.permute.xlu0 %558
      %560 = vrot.lane.b32.xlu0 %v517, 1
      %v561 = vpop.permute.xlu0 %560
      %562 = vrot.lane.b32.xlu0 %v519, 1
      %v563 = vpop.permute.xlu0 %562
      %564 = vrot.lane.b32.xlu0 %v521, 1
      %v565 = vpop.permute.xlu0 %564
      %566 = vrot.lane.b32.xlu0 %v523, 1
      %v567 = vpop.permute.xlu0 %566
      %568 = vrot.lane.b32.xlu0 %v525, 1
      %v569 = vpop.permute.xlu0 %568
      %570 = vrot.lane.b32.xlu0 %v527, 1
      %v571 = vpop.permute.xlu0 %570
      %572 = vrot.lane.b32.xlu0 %v529, 1
      %v573 = vpop.permute.xlu0 %572
      %574 = vrot.lane.b32.xlu0 %v531, 1
      %v575 = vpop.permute.xlu0 %574
      %vm576 = vcmp.lt.s32.totalorder %v262, 1
      %v577 = vsel %vm576, %v533, %v555
      %v578 = vsel %vm576, %v535, %v557
      %v579 = vsel %vm576, %v537, %v559
      %v580 = vsel %vm576, %v539, %v561
      %v581 = vsel %vm576, %v541, %v563
      %v582 = vsel %vm576, %v543, %v565
      %v583 = vsel %vm576, %v545, %v567
      %v584 = vsel %vm576, %v547, %v569
      %v585 = vsel %vm576, %v549, %v571
      %v586 = vsel %vm576, %v551, %v573
      %v587 = vsel %vm576, %v553, %v575
      %v588 = vsel %vm576, %v555, %v533
      %v589 = vsel %vm576, %v557, %v535
      %v590 = vsel %vm576, %v559, %v537
      %v591 = vsel %vm576, %v561, %v539
      %v592 = vsel %vm576, %v563, %v541
      %v593 = vsel %vm576, %v565, %v543
      %v594 = vsel %vm576, %v567, %v545
      %v595 = vsel %vm576, %v569, %v547
      %v596 = vsel %vm576, %v571, %v549
      %v597 = vsel %vm576, %v573, %v551
      %v598 = vsel %vm576, %v575, %v553
      %vm599 = vcmp.ge.s32.totalorder %v262, 1
      %vm600 = vcmp.ge.s32.totalorder %v263, 1
      %v601 = vsel %vm599, %v588, 0.0
      %v602 = vsel %vm600, %v577, 0.0
      %v603 = vsel %vm599, %v589, 0.0
      %v604 = vsel %vm600, %v578, 0.0
      %v605 = vsel %vm599, %v590, 0.0
      %v606 = vsel %vm600, %v579, 0.0
      %v607 = vsel %vm599, %v591, 0.0
      %v608 = vsel %vm600, %v580, 0.0
      %v609 = vsel %vm599, %v592, 0.0
      %v610 = vsel %vm600, %v581, 0.0
      %v611 = vsel %vm599, %v593, 0.0
      %v612 = vsel %vm600, %v582, 0.0
      %v613 = vsel %vm599, %v594, 0.0
      %v614 = vsel %vm600, %v583, 0.0
      %v615 = vsel %vm599, %v595, 0.0
      %v616 = vsel %vm600, %v584, 0.0
      %v617 = vsel %vm599, %v596, 0.0
      %v618 = vsel %vm600, %v585, 0.0
      %v619 = vsel %vm599, %v597, 0.0
      %v620 = vsel %vm600, %v586, 0.0
      %v621 = vsel %vm599, %v598, 0.0
      %v622 = vsel %vm600, %v587, 0.0
      %v623 = vmax.f32 %v510, %v601
      %v624 = vmax.f32 %v511, %v602
      %v625 = vmax.f32 %v512, %v603
      %v626 = vmax.f32 %v513, %v604
      %v627 = vmax.f32 %v514, %v605
      %v628 = vmax.f32 %v515, %v606
      %v629 = vmax.f32 %v516, %v607
      %v630 = vmax.f32 %v517, %v608
      %v631 = vmax.f32 %v518, %v609
      %v632 = vmax.f32 %v519, %v610
      %v633 = vmax.f32 %v520, %v611
      %v634 = vmax.f32 %v521, %v612
      %v635 = vmax.f32 %v522, %v613
      %v636 = vmax.f32 %v523, %v614
      %v637 = vmax.f32 %v524, %v615
      %v638 = vmax.f32 %v525, %v616
      %v639 = vmax.f32 %v526, %v617
      %v640 = vmax.f32 %v527, %v618
      %v641 = vmax.f32 %v528, %v619
      %v642 = vmax.f32 %v529, %v620
      %v643 = vmax.f32 %v530, %v621
      %v644 = vmax.f32 %v531, %v622
      %645 = vrot.lane.b32.xlu0 %v510, 127
      %v646 = vpop.permute.xlu0 %645
      %647 = vrot.lane.b32.xlu0 %v512, 127
      %v648 = vpop.permute.xlu0 %647
      %649 = vrot.lane.b32.xlu0 %v514, 127
      %v650 = vpop.permute.xlu0 %649
      %651 = vrot.lane.b32.xlu0 %v516, 127
      %v652 = vpop.permute.xlu0 %651
      %653 = vrot.lane.b32.xlu0 %v518, 127
      %v654 = vpop.permute.xlu0 %653
      %655 = vrot.lane.b32.xlu0 %v520, 127
      %v656 = vpop.permute.xlu0 %655
      %657 = vrot.lane.b32.xlu0 %v522, 127
      %v658 = vpop.permute.xlu0 %657
      %659 = vrot.lane.b32.xlu0 %v524, 127
      %v660 = vpop.permute.xlu0 %659
      %661 = vrot.lane.b32.xlu0 %v526, 127
      %v662 = vpop.permute.xlu0 %661
      %663 = vrot.lane.b32.xlu0 %v528, 127
      %v664 = vpop.permute.xlu0 %663
      %665 = vrot.lane.b32.xlu0 %v530, 127
      %v666 = vpop.permute.xlu0 %665
      %667 = vrot.lane.b32.xlu0 %v511, 127
      %v668 = vpop.permute.xlu0 %667
      %669 = vrot.lane.b32.xlu0 %v513, 127
      %v670 = vpop.permute.xlu0 %669
      %671 = vrot.lane.b32.xlu0 %v515, 127
      %v672 = vpop.permute.xlu0 %671
      %673 = vrot.lane.b32.xlu0 %v517, 127
      %v674 = vpop.permute.xlu0 %673
      %675 = vrot.lane.b32.xlu0 %v519, 127
      %v676 = vpop.permute.xlu0 %675
      %677 = vrot.lane.b32.xlu0 %v521, 127
      %v678 = vpop.permute.xlu0 %677
      %679 = vrot.lane.b32.xlu0 %v523, 127
      %v680 = vpop.permute.xlu0 %679
      %681 = vrot.lane.b32.xlu0 %v525, 127
      %v682 = vpop.permute.xlu0 %681
      %683 = vrot.lane.b32.xlu0 %v527, 127
      %v684 = vpop.permute.xlu0 %683
      %685 = vrot.lane.b32.xlu0 %v529, 127
      %v686 = vpop.permute.xlu0 %685
      %687 = vrot.lane.b32.xlu0 %v531, 127
      %v688 = vpop.permute.xlu0 %687
      %vm689 = vcmp.lt.s32.totalorder %v262, 127
      %v690 = vsel %vm689, %v646, %v668
      %v691 = vsel %vm689, %v648, %v670
      %v692 = vsel %vm689, %v650, %v672
      %v693 = vsel %vm689, %v652, %v674
      %v694 = vsel %vm689, %v654, %v676
      %v695 = vsel %vm689, %v656, %v678
      %v696 = vsel %vm689, %v658, %v680
      %v697 = vsel %vm689, %v660, %v682
      %v698 = vsel %vm689, %v662, %v684
      %v699 = vsel %vm689, %v664, %v686
      %v700 = vsel %vm689, %v666, %v688
      %v701 = vsel %vm689, %v668, %v646
      %v702 = vsel %vm689, %v670, %v648
      %v703 = vsel %vm689, %v672, %v650
      %v704 = vsel %vm689, %v674, %v652
      %v705 = vsel %vm689, %v676, %v654
      %v706 = vsel %vm689, %v678, %v656
      %v707 = vsel %vm689, %v680, %v658
      %v708 = vsel %vm689, %v682, %v660
      %v709 = vsel %vm689, %v684, %v662
      %v710 = vsel %vm689, %v686, %v664
      %v711 = vsel %vm689, %v688, %v666
      %vm712 = vcmp.lt.s32.totalorder %v262, 255
      %vm713 = vcmp.lt.s32.totalorder %v263, 255
      %v714 = vsel %vm712, %v690, 0.0
      %v715 = vsel %vm713, %v701, 0.0
      %v716 = vsel %vm712, %v691, 0.0
      %v717 = vsel %vm713, %v702, 0.0
      %v718 = vsel %vm712, %v692, 0.0
      %v719 = vsel %vm713, %v703, 0.0
      %v720 = vsel %vm712, %v693, 0.0
      %v721 = vsel %vm713, %v704, 0.0
      %v722 = vsel %vm712, %v694, 0.0
      %v723 = vsel %vm713, %v705, 0.0
      %v724 = vsel %vm712, %v695, 0.0
      %v725 = vsel %vm713, %v706, 0.0
      %v726 = vsel %vm712, %v696, 0.0
      %v727 = vsel %vm713, %v707, 0.0
      %v728 = vsel %vm712, %v697, 0.0
      %v729 = vsel %vm713, %v708, 0.0
      %v730 = vsel %vm712, %v698, 0.0
      %v731 = vsel %vm713, %v709, 0.0
      %v732 = vsel %vm712, %v699, 0.0
      %v733 = vsel %vm713, %v710, 0.0
      %v734 = vsel %vm712, %v700, 0.0
      %v735 = vsel %vm713, %v711, 0.0
      %v736 = vmax.f32 %v623, %v714
      %v737 = vmax.f32 %v624, %v715
      %v738 = vmax.f32 %v625, %v716
      %v739 = vmax.f32 %v626, %v717
      %v740 = vmax.f32 %v627, %v718
      %v741 = vmax.f32 %v628, %v719
      %v742 = vmax.f32 %v629, %v720
      %v743 = vmax.f32 %v630, %v721
      %v744 = vmax.f32 %v631, %v722
      %v745 = vmax.f32 %v632, %v723
      %v746 = vmax.f32 %v633, %v724
      %v747 = vmax.f32 %v634, %v725
      %v748 = vmax.f32 %v635, %v726
      %v749 = vmax.f32 %v636, %v727
      %v750 = vmax.f32 %v637, %v728
      %v751 = vmax.f32 %v638, %v729
      %v752 = vmax.f32 %v639, %v730
      %v753 = vmax.f32 %v640, %v731
      %v754 = vmax.f32 %v641, %v732
      %v755 = vmax.f32 %v642, %v733
      %v756 = vmax.f32 %v643, %v734
      %v757 = vmax.f32 %v644, %v735
      %v758 = vtrunc.f32 %v736
      %v759 = vtrunc.f32 %v737
      %v760 = vtrunc.f32 %v738
      %v761 = vtrunc.f32 %v739
      %v762 = vtrunc.f32 %v740
      %v763 = vtrunc.f32 %v741
      %v764 = vtrunc.f32 %v742
      %v765 = vtrunc.f32 %v743
      %v766 = vtrunc.f32 %v744
      %v767 = vtrunc.f32 %v745
      %v768 = vtrunc.f32 %v746
      %v769 = vtrunc.f32 %v747
      %v770 = vtrunc.f32 %v748
      %v771 = vtrunc.f32 %v749
      %v772 = vtrunc.f32 %v750
      %v773 = vtrunc.f32 %v751
      %v774 = vtrunc.f32 %v752
      %v775 = vtrunc.f32 %v753
      %v776 = vtrunc.f32 %v754
      %v777 = vtrunc.f32 %v755
      %v778 = vtrunc.f32 %v756
      %v779 = vtrunc.f32 %v757
      %v780 = vpack.c.f32.eXmY %v758, %v760, 312
      %v784 = vpack.c.f32.eXmY %v762, %v764, 312
      %v788 = vpack.c.b8 %v784, %v780
      %v790 = vpack.c.f32.eXmY %v759, %v761, 312
      %v794 = vpack.c.f32.eXmY %v763, %v765, 312
      %v798 = vpack.c.b8 %v794, %v790
      %v800 = vpack.c.f32.eXmY %v766, %v768, 312
      %v804 = vpack.c.f32.eXmY %v770, %v772, 312
      %v808 = vpack.c.b8 %v804, %v800
      %v810 = vpack.c.f32.eXmY %v767, %v769, 312
      %v814 = vpack.c.f32.eXmY %v771, %v773, 312
      %v818 = vpack.c.b8 %v814, %v810
      %v820 = vpack.c.f32.eXmY %v774, %v776, 312
      %v824 = vpack.c.f32.eXmY %v778, %v778, 312
      %v828 = vpack.c.b8 %v824, %v820
      %v830 = vpack.c.f32.eXmY %v775, %v777, 312
      %v834 = vpack.c.f32.eXmY %v779, %v779, 312
      %v838 = vpack.c.b8 %v834, %v830
      %v840 = vunpack.c.0.s8 %v788
      %v841 = vunpack.c.0.s8 %v798
      %v842 = vunpack.c.1.s8 %v788
      %v843 = vunpack.c.1.s8 %v798
      %v844 = vunpack.c.2.s8 %v788
      %v845 = vunpack.c.2.s8 %v798
      %v846 = vunpack.c.3.s8 %v788
      %v847 = vunpack.c.3.s8 %v798
      %v848 = vunpack.c.0.s8 %v808
      %v849 = vunpack.c.0.s8 %v818
      %v850 = vunpack.c.1.s8 %v808
      %v851 = vunpack.c.1.s8 %v818
      %v852 = vunpack.c.2.s8 %v808
      %v853 = vunpack.c.2.s8 %v818
      %v854 = vunpack.c.3.s8 %v808
      %v855 = vunpack.c.3.s8 %v818
      %v856 = vunpack.c.0.s8 %v828
      %v857 = vunpack.c.0.s8 %v838
      %v858 = vunpack.c.1.s8 %v828
      %v859 = vunpack.c.1.s8 %v838
      %v860 = vunpack.c.2.s8 %v828
      %v861 = vunpack.c.2.s8 %v838
      %v862 = vpack.c.b16 %v841, %v840
      %v863 = vpack.c.b8 %v862, %v862
      %v864 = vpack.c.b16 %v843, %v842
      %v865 = vpack.c.b8 %v864, %v864
      %v866 = vpack.c.b16 %v845, %v844
      %v867 = vpack.c.b8 %v866, %v866
      %v868 = vpack.c.b16 %v847, %v846
      %v869 = vpack.c.b8 %v868, %v868
      %v870 = vpack.c.b16 %v849, %v848
      %v871 = vpack.c.b8 %v870, %v870
      %v872 = vpack.c.b16 %v851, %v850
      %v873 = vpack.c.b8 %v872, %v872
      %v874 = vpack.c.b16 %v853, %v852
      %v875 = vpack.c.b8 %v874, %v874
      %v876 = vpack.c.b16 %v855, %v854
      %v877 = vpack.c.b8 %v876, %v876
      %v878 = vpack.c.b16 %v857, %v856
      %v879 = vpack.c.b8 %v878, %v878
      %v880 = vpack.c.b16 %v859, %v858
      %v881 = vpack.c.b8 %v880, %v880
      %v882 = vpack.c.b16 %v861, %v860
      %v883 = vpack.c.b8 %v882, %v882
      %884 = vst [vmem:[%s159] sm:$0xf] %v863
      %885 = vst [vmem:[%s159 + $0x4] sm:$0xf] %v865
      %886 = vst [vmem:[%s159 + $0x8] sm:$0xf] %v867
      %887 = vst [vmem:[%s159 + $0xc] sm:$0xf] %v869
      %888 = vst [vmem:[%s159 + $0x10] sm:$0xf] %v871
      %889 = vst [vmem:[%s159 + $0x14] sm:$0xf] %v873
      %890 = vst [vmem:[%s159 + $0x18] sm:$0xf] %v875
      %891 = vst [vmem:[%s159 + $0x1c] sm:$0xf] %v877
      %892 = vst [vmem:[%s159 + $0x20] sm:$0xf] %v879
      %893 = vst [vmem:[%s159 + $0x24] sm:$0xf] %v881
      %894 = vst [vmem:[%s159 + $0x28] sm:$0xf] %v883
      %s895 = smul.u32 11, %s17
      %p896 = scmp.lt.s32.totalorder %s16, 1
      %s897 = scalar_select %p896, %s16, 1
      %p898 = scmp.lt.s32.totalorder %s895, 10
      %s899 = scalar_select %p898, %s895, 10
      %s900 = smul.addr %s899, 2
      %s901 = smul.addr %s897, 22
      %s902 = sadd.s32 %s900, %s901
      %s903 = smul.addr %s902, 2
      %s904 = scalar_lea.vmem %s1, %s903
      // Predicated region
      $region25: #{tpu_custom_call.1} parent=23 // pred_check
        %p905 = pneg %p72
      $region26: #{tpu_custom_call.1} parent=23 // pred_check_branch
        %907 = sbr.rel (%p905) target = $region28
      $region27: #{tpu_custom_call.1} parent=23 // pred_region
        %s908 = smul.u32 11, %s17
      $region28: #{tpu_custom_call.1} parent=23 // pred_fallthru
        _
    $region24: #{tpu_custom_call.1} parent=5 // pred_fallthru
      _
    %p909 = scmp.le.s32.totalorder 2, %s7
    // Predicated region
    $region29: #{tpu_custom_call.1} parent=5 // pred_check
      %p910 = pneg %p909
    $region30: #{tpu_custom_call.1} parent=5 // pred_check_branch
      %912 = sbr.rel (%p910) target = $region32
    $region31: #{tpu_custom_call.1} parent=5 // pred_region
      %s913 = ssub.s32 %s7, 2
      // Predicated region
      $region33: #{tpu_custom_call.1} parent=31 // pred_check
        %p914 = pneg %p78
      $region34: #{tpu_custom_call.1} parent=31 // pred_check_branch
        %916 = sbr.rel (%p914) target = $region36
      $region35: #{tpu_custom_call.1} parent=31 // pred_region
        %s917 = smul.u32 11, %s19
        %p918 = scmp.lt.s32.totalorder %s18, 1
        %s919 = scalar_select %p918, %s18, 1
        %p920 = scmp.lt.s32.totalorder %s917, 10
        %s921 = scalar_select %p920, %s917, 10
        %s922 = smul.addr %s921, 2
        %s923 = smul.addr %s919, 22
        %s924 = sadd.s32 %s922, %s923
        %s925 = smul.addr %s924, 2
        %s926 = scalar_lea.vmem %s1, %s925
      $region36: #{tpu_custom_call.1} parent=31 // pred_fallthru
        _
    $region32: #{tpu_custom_call.1} parent=5 // pred_fallthru
      _
  $region6: #{tpu_custom_call.1} parent=0 // loop_footer
    %s11 = sadd.s32 1, %s7
  $region7: #{tpu_custom_call.1} parent=0 // loop_footer_branch
    %6 = sbr.rel target = $region3
  $region8: #{tpu_custom_call.1} parent=0 // loop_exit
    _

</llo_original>
